<compile_context>
chip_gen: v7x
topology: tpu7x:2x2x1
jax: 0.10.0
libtpu: 0.0.40
codegen_flags: <defaults>
</compile_context>

<pallas_src>
import functools
import math

import jax
import jax.numpy as jnp
from jax import lax
from jax.experimental import pallas as pl
from jax.experimental.pallas import tpu as pltpu


def _hsgt_kernel(x_ref, pt_ref, o_ref, *, T):
    """One (B, tile_n) output tile of the HSGT pairwise distance.

    x_ref : (B, D)       gathered query points (resident: constant index_map)
    pt_ref: (TN, D)      points tile in natural (row-major) layout
    o_ref : (B, TN)      output distances (lane-dense stores)
    """
    f32 = jnp.float32

    # --- query side (tiny: B*D elements, recomputed per step on purpose: with
    # a "parallel" grid axis a second TensorCore never sees step 0, so nothing
    # may be cached in scratch across steps) ---
    zx = x_ref[...].astype(f32) * T                         # (B, D)
    mxp = jnp.max(zx, axis=1, keepdims=True)                # (B, 1)
    mxn = jnp.max(-zx, axis=1, keepdims=True)               # (B, 1)
    a_pos = jnp.exp(zx - mxp)                               # (B, D)
    a_neg = jnp.exp(-zx - mxn)                              # (B, D)

    # --- points side ---
    # Transpose the (TN, D) tile to (D, TN) so TN sits on the 128-lane axis:
    # the two big exps below become lane-dense (4x fewer EUP vreg passes than
    # operating on the lane-sparse (TN, 32) layout).  Done as (T*I_D) @ p^T on
    # the MXU (transposed-RHS dot_general, guaranteed lowering), which also
    # folds the T scaling for free.
    D = x_ref.shape[1]
    rows = lax.broadcasted_iota(jnp.int32, (D, D), 0)
    cols = lax.broadcasted_iota(jnp.int32, (D, D), 1)
    eye_T = jnp.where(rows == cols, f32(T), f32(0.0))       # (D, D) = T * I
    zpT = lax.dot_general(
        eye_T, pt_ref[...].astype(f32),
        dimension_numbers=(((1,), (1,)), ((), ())),
        preferred_element_type=f32)                         # (D, TN) = T * points^T

    mpn = jnp.max(-zpT, axis=0, keepdims=True)              # (1, TN) pairs with +x
    mpp = jnp.max(zpT, axis=0, keepdims=True)               # (1, TN) pairs with -x
    b_pos = jnp.exp(-zpT - mpn)                             # (D, TN) lane-dense exp
    b_neg = jnp.exp(zpT - mpp)                              # (D, TN) lane-dense exp

    # --- contraction over D on the MXU (f32 accumulation) ---
    s_pos = jnp.dot(a_pos, b_pos, preferred_element_type=f32)   # (B, TN)
    s_neg = jnp.dot(a_neg, b_neg, preferred_element_type=f32)   # (B, TN)

    # Stabilizer mx_b + mp_n >= per-pair max so all exp args are <= 0 (no
    # overflow).  Clamp away from 0 so extreme T * point spreads give a large
    # finite distance instead of -inf (review correctness concern).
    tiny = f32(jnp.finfo(jnp.float32).tiny)
    lse_pos = mxp + mpn + jnp.log(jnp.maximum(s_pos, tiny))     # (B, TN)
    lse_neg = mxn + mpp + jnp.log(jnp.maximum(s_neg, tiny))     # (B, TN)
    o_ref[...] = ((lse_pos + lse_neg) * (1.0 / T)).astype(o_ref.dtype)


def _round_up(x, m):
    return ((x + m - 1) // m) * m


def _pick_tile_n(N):
    """Tile size over the all-points axis.

    Small N (<= 2048): one grid step — per-step overhead (~0.35 us) dwarfs the
    real work at these sizes, so one step is strictly best on every chip.
    Large N: target ~8K-wide tiles but keep the step count EVEN (>= 2) so the
    "parallel" axis shards across both TensorCores on v7x; on v5e/v6e (1 TC)
    this just means a handful of big, HBM-bound steps.
    """
    if N <= 2048:
        return _round_up(N, 128)
    steps = pl.cdiv(N, 8192)
    steps = max(2, steps + (steps % 2))      # even, >= 2
    return _round_up(pl.cdiv(N, steps), 128)


def hsgt_forward(points, idx, T, *, tile_n=None):
    """HSGT.forward(idx) == distance(points[idx], points)."""
    points = jnp.asarray(points, dtype=jnp.float32)
    x = points[idx]                           # gather = glue (outside kernel)
    B, D = x.shape
    N = points.shape[0]

    if tile_n is None:
        tile_n = _pick_tile_n(N)
    N_pad = _round_up(max(N, tile_n), tile_n)
    B_pad = _round_up(B, 8)

    # Only materialize padding when actually needed (zero rows are harmless:
    # they produce finite values that are sliced off below).  No transpose:
    # points go to the kernel in their natural (N, D) layout.
    pts = points if N_pad == N else jnp.pad(points, ((0, N_pad - N), (0, 0)))
    xq = x if B_pad == B else jnp.pad(x, ((0, B_pad - B), (0, 0)))

    kernel = functools.partial(_hsgt_kernel, T=float(T))

    out = pl.pallas_call(
        kernel,
        out_shape=jax.ShapeDtypeStruct((B_pad, N_pad), jnp.float32),
        grid_spec=pltpu.PrefetchScalarGridSpec(
            num_scalar_prefetch=0,
            grid=(N_pad // tile_n,),
            in_specs=[
                pl.BlockSpec((B_pad, D), lambda j: (0, 0)),     # queries: resident
                pl.BlockSpec((tile_n, D), lambda j: (j, 0)),    # points tile (no wrapper .T)
            ],
            out_specs=pl.BlockSpec((B_pad, tile_n), lambda j: (0, j)),
        ),
        compiler_params=pltpu.CompilerParams(
            dimension_semantics=("parallel",)),
    )(xq, pts)

    return out[:B, :N]


def hsgt_reference(points, idx, T):
    """Pure-JAX reference identical to the PyTorch forward."""
    x = points[idx]
    diff = x[:, None, :] - points[None, :, :]
    dist = jax.scipy.special.logsumexp(diff * T, axis=2) / T
    dist = dist + jax.scipy.special.logsumexp(-diff * T, axis=2) / T
    return dist


if __name__ == "__main__":
    # Module hyper-params: HSGT(T, n, dim, device) -> points of shape (n, dim+1)
    T = 0.5
    n = 256
    dim = 31            # -> D = dim + 1 = 32
    D = dim + 1
    B = 8               # number of query indices

    key = jax.random.PRNGKey(0)
    kp, ki = jax.random.split(key)

    # randompoints(n, D): Normal(0, stdv) with stdv = 1/sqrt(D)
    stdv = 1.0 / math.sqrt(D)
    points = stdv * jax.random.normal(kp, (n, D), dtype=jnp.float32)
    idx = jax.random.randint(ki, (B,), 0, n)

    out = jax.block_until_ready(hsgt_forward(points, idx, T))
    ref = hsgt_reference(points, idx, T)
    assert out.shape == (B, n)
    assert jnp.allclose(out, ref, atol=1e-4, rtol=1e-4), "mismatch vs reference"

    # Ragged case exercising the padding path (N and B not tile multiples).
    kp2, ki2 = jax.random.split(jax.random.PRNGKey(1))
    points2 = stdv * jax.random.normal(kp2, (200, D), dtype=jnp.float32)
    idx2 = jax.random.randint(ki2, (5,), 0, 200)
    out2 = jax.block_until_ready(hsgt_forward(points2, idx2, T))
    ref2 = hsgt_reference(points2, idx2, T)
    assert out2.shape == (5, 200)
    assert jnp.allclose(out2, ref2, atol=1e-4, rtol=1e-4), "mismatch vs reference (padded)"

    # Larger-N case exercising the multi-step (even step count) tiling path.
    kp3, ki3 = jax.random.split(jax.random.PRNGKey(2))
    points3 = stdv * jax.random.normal(kp3, (3000, D), dtype=jnp.float32)
    idx3 = jax.random.randint(ki3, (6,), 0, 3000)
    out3 = jax.block_until_ready(hsgt_forward(points3, idx3, T))
    ref3 = hsgt_reference(points3, idx3, T)
    assert out3.shape == (6, 3000)
    assert jnp.allclose(out3, ref3, atol=1e-4, rtol=1e-4), "mismatch vs reference (multi-step)"

    print("KERNEL_OK")
</pallas_src>

<mosaic_0001>
module attributes {stable_mosaic.version = 11 : i64} {
  func.func @_hsgt_kernel(%arg0: i32, %arg1: memref<8x32xf32, #tpu.memory_space<vmem>>, %arg2: memref<256x32xf32, #tpu.memory_space<vmem>>, %arg3: memref<8x256xf32, #tpu.memory_space<vmem>>) attributes {dimension_semantics = [#tpu.dimension_semantics<parallel>], iteration_bounds = array<i64: 1>, scalar_prefetch = 0 : i64, scratch_operands = 0 : i64, tpu.core_type = #tpu.core_type<tc>, window_params = [{pipeline_mode = #tpu.pipeline_mode<synchronous>, transform_indices = @transform_0, window_bounds = array<i64: 8, 32>}, {transform_indices = @transform_1, window_bounds = array<i64: 256, 32>}, {transform_indices = @transform_2, window_bounds = array<i64: 8, 256>}]} {
    %c0 = arith.constant 0 : index
    %c0_0 = arith.constant 0 : index
    %0 = vector.load %arg1[%c0, %c0_0] : memref<8x32xf32, #tpu.memory_space<vmem>>, vector<8x32xf32>
    %cst = arith.constant 5.000000e-01 : f32
    %1 = vector.broadcast %cst : f32 to vector<8x32xf32>
    %2 = arith.mulf %0, %1 : vector<8x32xf32>
    %cst_1 = arith.constant dense<0xFF800000> : vector<8xf32>
    %3 = vector.multi_reduction <maximumf>, %2, %cst_1 [1] : vector<8x32xf32> to vector<8xf32>
    %4 = vector.shape_cast %3 : vector<8xf32> to vector<8x1xf32>
    %cst_2 = arith.constant 0.000000e+00 : f32
    %5 = vector.broadcast %cst_2 : f32 to vector<8x32xf32>
    %6 = arith.subf %5, %2 : vector<8x32xf32>
    %cst_3 = arith.constant dense<0xFF800000> : vector<8xf32>
    %7 = vector.multi_reduction <maximumf>, %6, %cst_3 [1] : vector<8x32xf32> to vector<8xf32>
    %8 = vector.shape_cast %7 : vector<8xf32> to vector<8x1xf32>
    %9 = vector.broadcast %4 : vector<8x1xf32> to vector<8x32xf32>
    %10 = arith.subf %2, %9 : vector<8x32xf32>
    %11 = math.exp %10 : vector<8x32xf32>
    %cst_4 = arith.constant 0.000000e+00 : f32
    %12 = vector.broadcast %cst_4 : f32 to vector<8x32xf32>
    %13 = arith.subf %12, %2 : vector<8x32xf32>
    %14 = vector.broadcast %8 : vector<8x1xf32> to vector<8x32xf32>
    %15 = arith.subf %13, %14 : vector<8x32xf32>
    %16 = math.exp %15 : vector<8x32xf32>
    %17 = tpu.iota {dimensions = array<i32: 0>} : vector<32x32xi32>
    %18 = tpu.iota {dimensions = array<i32: 1>} : vector<32x32xi32>
    %19 = arith.cmpi eq, %17, %18 : vector<32x32xi32>
    %cst_5 = arith.constant 5.000000e-01 : f32
    %cst_6 = arith.constant 0.000000e+00 : f32
    %20 = vector.broadcast %cst_5 : f32 to vector<32x32xf32>
    %21 = vector.broadcast %cst_6 : f32 to vector<32x32xf32>
    %22 = arith.select %19, %20, %21 : vector<32x32xi1>, vector<32x32xf32>
    %c0_7 = arith.constant 0 : index
    %c0_8 = arith.constant 0 : index
    %23 = vector.load %arg2[%c0_7, %c0_8] : memref<256x32xf32, #tpu.memory_space<vmem>>, vector<256x32xf32>
    %cst_9 = arith.constant dense<0.000000e+00> : vector<32x256xf32>
    %24 = tpu.matmul %22, %23, %cst_9 {dimension_numbers = #tpu.dot_dimension_numbers<[1], [1], [0], [0], [0, 0, 1, 0], [], []>} : vector<32x32xf32>, vector<256x32xf32>, vector<32x256xf32> -> vector<32x256xf32>
    %cst_10 = arith.constant 0.000000e+00 : f32
    %25 = vector.broadcast %cst_10 : f32 to vector<32x256xf32>
    %26 = arith.subf %25, %24 : vector<32x256xf32>
    %cst_11 = arith.constant dense<0xFF800000> : vector<256xf32>
    %27 = vector.multi_reduction <maximumf>, %26, %cst_11 [0] : vector<32x256xf32> to vector<256xf32>
    %28 = vector.shape_cast %27 : vector<256xf32> to vector<1x256xf32>
    %cst_12 = arith.constant dense<0xFF800000> : vector<256xf32>
    %29 = vector.multi_reduction <maximumf>, %24, %cst_12 [0] : vector<32x256xf32> to vector<256xf32>
    %30 = vector.shape_cast %29 : vector<256xf32> to vector<1x256xf32>
    %cst_13 = arith.constant 0.000000e+00 : f32
    %31 = vector.broadcast %cst_13 : f32 to vector<32x256xf32>
    %32 = arith.subf %31, %24 : vector<32x256xf32>
    %33 = vector.broadcast %28 : vector<1x256xf32> to vector<32x256xf32>
    %34 = arith.subf %32, %33 : vector<32x256xf32>
    %35 = math.exp %34 : vector<32x256xf32>
    %36 = vector.broadcast %30 : vector<1x256xf32> to vector<32x256xf32>
    %37 = arith.subf %24, %36 : vector<32x256xf32>
    %38 = math.exp %37 : vector<32x256xf32>
    %cst_14 = arith.constant dense<0.000000e+00> : vector<8x256xf32>
    %39 = tpu.matmul %11, %35, %cst_14 {dimension_numbers = #tpu.dot_dimension_numbers<[1], [0], [0], [1], [0, 0, 1, 1], [], []>} : vector<8x32xf32>, vector<32x256xf32>, vector<8x256xf32> -> vector<8x256xf32>
    %cst_15 = arith.constant dense<0.000000e+00> : vector<8x256xf32>
    %40 = tpu.matmul %16, %38, %cst_15 {dimension_numbers = #tpu.dot_dimension_numbers<[1], [0], [0], [1], [0, 0, 1, 1], [], []>} : vector<8x32xf32>, vector<32x256xf32>, vector<8x256xf32> -> vector<8x256xf32>
    %41 = vector.broadcast %4 : vector<8x1xf32> to vector<8x256xf32>
    %42 = vector.broadcast %28 : vector<1x256xf32> to vector<8x256xf32>
    %43 = arith.addf %41, %42 : vector<8x256xf32>
    %cst_16 = arith.constant 1.17549435E-38 : f32
    %44 = vector.broadcast %cst_16 : f32 to vector<8x256xf32>
    %45 = arith.maximumf %39, %44 : vector<8x256xf32>
    %46 = math.log %45 : vector<8x256xf32>
    %47 = arith.addf %43, %46 : vector<8x256xf32>
    %48 = vector.broadcast %8 : vector<8x1xf32> to vector<8x256xf32>
    %49 = vector.broadcast %30 : vector<1x256xf32> to vector<8x256xf32>
    %50 = arith.addf %48, %49 : vector<8x256xf32>
    %cst_17 = arith.constant 1.17549435E-38 : f32
    %51 = vector.broadcast %cst_17 : f32 to vector<8x256xf32>
    %52 = arith.maximumf %40, %51 : vector<8x256xf32>
    %53 = math.log %52 : vector<8x256xf32>
    %54 = arith.addf %50, %53 : vector<8x256xf32>
    %55 = arith.addf %47, %54 : vector<8x256xf32>
    %cst_18 = arith.constant 2.000000e+00 : f32
    %56 = vector.broadcast %cst_18 : f32 to vector<8x256xf32>
    %57 = arith.mulf %55, %56 : vector<8x256xf32>
    %c0_19 = arith.constant 0 : index
    %c0_20 = arith.constant 0 : index
    %58 = vector.load %arg3[%c0_19, %c0_20] : memref<8x256xf32, #tpu.memory_space<vmem>>, vector<8x256xf32>
    tpu.vector_store %arg3[%c0_19, %c0_20], %57 {strides = array<i32>} : memref<8x256xf32, #tpu.memory_space<vmem>>, vector<8x256xf32>,
    return
  }
  func.func @transform_0(%arg0: i32) -> (i32, i32) {
    %c0_i32 = arith.constant 0 : i32
    %c0_i32_0 = arith.constant 0 : i32
    %c0_i32_1 = arith.constant 0 : i32
    return %c0_i32, %c0_i32_0 : i32, i32
  }
  func.func @transform_1(%arg0: i32) -> (i32, i32) {
    %c0_i32 = arith.constant 0 : i32
    %c0_i32_0 = arith.constant 0 : i32
    return %arg0, %c0_i32 : i32, i32
  }
  func.func @transform_2(%arg0: i32) -> (i32, i32) {
    %c0_i32 = arith.constant 0 : i32
    %c0_i32_0 = arith.constant 0 : i32
    return %c0_i32, %arg0 : i32, i32
  }
}

</mosaic_0001>

<llo_original>
// kernel: tpu_custom_call.1
$region0: #{tpu_custom_call.1}
  #allocation0 [shape = 'u32[]', space=smem, size = 0x4, offset = 0x4, fixed_abs, tag = 'smem constant byte address 0x4 - core index']
  #allocation1 [shape = 'u32[144,128]{1,0:T(1,128)}', space=vmem, size = 0x12000, scoped, tag = 'internal scratch']
  %s0 = inlined_call_operand.vmem [shape: f32[8,32], index: 0, kind: input, shape index: {}]
  %s1 = inlined_call_operand.vmem [shape: f32[256,32], index: 1, kind: input, shape index: {}]
  %s2 = inlined_call_operand.hbm [shape: f32[8,256], index: 2, kind: output, shape index: {}]
  %s3 = sld [smem:[#allocation0]]
  $region18: #{tpu_custom_call.1} parent=0
    _
  %s5 = ssub.s32 1, %s3
  %s6 = scalar_select 0, %s5, %s3
  $region1: #{tpu_custom_call.1} parent=0
    #allocation2 [shape = 'u8[8192]{0}', space=vmem, size = 0x2000, scoped, tag = 'output window, operand 0, single buffered']
    #allocation3 [shape = 's32[1]{0}', space=sflag, size = 0x4, scoped, tag = 'scoped memory for tpu_custom_call.1']
    %7 = vsyncpa [#allocation3], 0
    // Predicated region
    $region2: #{tpu_custom_call.1} parent=1 // pred_check
      _
    $region3: #{tpu_custom_call.1} parent=1 // pred_check_branch
      %9 = sbr.rel (0) target = $region5
    $region4: #{tpu_custom_call.1} parent=1 // pred_region
      _
    $region5: #{tpu_custom_call.1} parent=1 // pred_fallthru
      _
    // Predicated region
    $region6: #{tpu_custom_call.1} parent=1 // pred_check
      _
    $region7: #{tpu_custom_call.1} parent=1 // pred_check_branch
      %11 = sbr.rel (0) target = $region9
    $region8: #{tpu_custom_call.1} parent=1 // pred_region
      _
    $region9: #{tpu_custom_call.1} parent=1 // pred_fallthru
      _
    %v12 = vld [vmem:[%s0] sm:$0xff]
    %v13 = vmul.f32 %v12, 0.5
    %vm14 = vcmask 261120
    %v15 = vsel %vm14, %v13, -inf
    %16 = vmax.xlane.f32.xlu0 %v15
    %v17 = vpop.xlane.xlu0 %16
    %v18 = vsub.f32 0.0, %v13
    %v19 = vsel %vm14, %v18, -inf
    %20 = vmax.xlane.f32.xlu0 %v19
    %v21 = vpop.xlane.xlu0 %20
    %v22 = vsub.f32 %v13, %v17
    %v23 = vmul.f32 %v22, 1.442695
    %v24 = vpow.pop %v23
    %v25 = vsub.f32 %v18, %v21
    %v26 = vmul.f32 %v25, 1.442695
    %v27 = vpow.pop %v26
    %v28 = vlaneseq
    %v29 = vshrl.u32 %v28, 7
    %v30 = vadd.s32 %v29, 8
    %v31 = vadd.s32 %v29, 16
    %v32 = vadd.s32 %v29, 24
    %v33 = vlaneseq
    %v34 = vand.u32 %v33, 127
    %vm35 = vcmp.eq.s32.totalorder %v29, %v34
    %vm36 = vcmp.eq.s32.totalorder %v30, %v34
    %vm37 = vcmp.eq.s32.totalorder %v31, %v34
    %vm38 = vcmp.eq.s32.totalorder %v32, %v34
    %v39 = vsel %vm35, 0.5, 0.0
    %v40 = vsel %vm36, 0.5, 0.0
    %v41 = vsel %vm37, 0.5, 0.0
    %v42 = vsel %vm38, 0.5, 0.0
    %v43 = vld [vmem:[%s1] sm:$0xff]
    %v44 = vld [vmem:[%s1 + $0x8] sm:$0xff]
    %v45 = vld [vmem:[%s1 + $0x10] sm:$0xff]
    %v46 = vld [vmem:[%s1 + $0x18] sm:$0xff]
    %v47 = vld [vmem:[%s1 + $0x20] sm:$0xff]
    %v48 = vld [vmem:[%s1 + $0x28] sm:$0xff]
    %v49 = vld [vmem:[%s1 + $0x30] sm:$0xff]
    %v50 = vld [vmem:[%s1 + $0x38] sm:$0xff]
    %v51 = vld [vmem:[%s1 + $0x40] sm:$0xff]
    %v52 = vld [vmem:[%s1 + $0x48] sm:$0xff]
    %v53 = vld [vmem:[%s1 + $0x50] sm:$0xff]
    %v54 = vld [vmem:[%s1 + $0x58] sm:$0xff]
    %v55 = vld [vmem:[%s1 + $0x60] sm:$0xff]
    %v56 = vld [vmem:[%s1 + $0x68] sm:$0xff]
    %v57 = vld [vmem:[%s1 + $0x70] sm:$0xff]
    %v58 = vld [vmem:[%s1 + $0x78] sm:$0xff]
    %v59 = vld [vmem:[%s1 + $0x80] sm:$0xff]
    %v60 = vld [vmem:[%s1 + $0x88] sm:$0xff]
    %v61 = vld [vmem:[%s1 + $0x90] sm:$0xff]
    %v62 = vld [vmem:[%s1 + $0x98] sm:$0xff]
    %v63 = vld [vmem:[%s1 + $0xa0] sm:$0xff]
    %v64 = vld [vmem:[%s1 + $0xa8] sm:$0xff]
    %v65 = vld [vmem:[%s1 + $0xb0] sm:$0xff]
    %v66 = vld [vmem:[%s1 + $0xb8] sm:$0xff]
    %v67 = vld [vmem:[%s1 + $0xc0] sm:$0xff]
    %v68 = vld [vmem:[%s1 + $0xc8] sm:$0xff]
    %v69 = vld [vmem:[%s1 + $0xd0] sm:$0xff]
    %v70 = vld [vmem:[%s1 + $0xd8] sm:$0xff]
    %v71 = vld [vmem:[%s1 + $0xe0] sm:$0xff]
    %v72 = vld [vmem:[%s1 + $0xe8] sm:$0xff]
    %v73 = vld [vmem:[%s1 + $0xf0] sm:$0xff]
    %v74 = vld [vmem:[%s1 + $0xf8] sm:$0xff]
    %v76 = vsel %vm14, %v39, 0
    %v79 = vsel %vm14, %v40, 0
    %v82 = vsel %vm14, %v41, 0
    %v85 = vsel %vm14, %v42, 0
    %v88 = vsel %vm14, %v43, 0
    %v91 = vsel %vm14, %v44, 0
    %v94 = vsel %vm14, %v45, 0
    %v97 = vsel %vm14, %v46, 0
    %v100 = vsel %vm14, %v47, 0
    %v103 = vsel %vm14, %v48, 0
    %v106 = vsel %vm14, %v49, 0
    %v109 = vsel %vm14, %v50, 0
    %v112 = vsel %vm14, %v51, 0
    %v115 = vsel %vm14, %v52, 0
    %v118 = vsel %vm14, %v53, 0
    %v121 = vsel %vm14, %v54, 0
    %v124 = vsel %vm14, %v55, 0
    %v127 = vsel %vm14, %v56, 0
    %v130 = vsel %vm14, %v57, 0
    %v133 = vsel %vm14, %v58, 0
    %v136 = vsel %vm14, %v59, 0
    %v139 = vsel %vm14, %v60, 0
    %v142 = vsel %vm14, %v61, 0
    %v145 = vsel %vm14, %v62, 0
    %v148 = vsel %vm14, %v63, 0
    %v151 = vsel %vm14, %v64, 0
    %v154 = vsel %vm14, %v65, 0
    %v157 = vsel %vm14, %v66, 0
    %v160 = vsel %vm14, %v67, 0
    %v163 = vsel %vm14, %v68, 0
    %v166 = vsel %vm14, %v69, 0
    %v169 = vsel %vm14, %v70, 0
    %v172 = vsel %vm14, %v71, 0
    %v175 = vsel %vm14, %v72, 0
    %v178 = vsel %vm14, %v73, 0
    %v181 = vsel %vm14, %v74, 0
    %183 = vmatprep.subr.mxu0 0.0
    %184 = vmatpush1.xpose.msra.mxu0 %v88
    %185 = vmatprep.subr.mxu0 0.0
    %186 = vmatpush1.xpose.msra.mxu0 %v91
    %187 = vmatprep.subr.mxu0 0.0
    %188 = vmatpush1.xpose.msra.mxu0 %v94
    %189 = vmatprep.subr.mxu0 0.0
    %190 = vmatpush1.xpose.msra.mxu0 %v97
    %191 = vmatprep.subr.mxu0 0.0
    %192 = vmatpush1.xpose.msra.mxu0 %v100
    %193 = vmatprep.subr.mxu0 0.0
    %194 = vmatpush1.xpose.msra.mxu0 %v103
    %195 = vmatprep.subr.mxu0 0.0
    %196 = vmatpush1.xpose.msra.mxu0 %v106
    %197 = vmatprep.subr.mxu0 0.0
    %198 = vmatpush1.xpose.msra.mxu0 %v109
    %199 = vmatprep.subr.mxu0 0.0
    %200 = vmatpush1.xpose.msra.mxu0 %v112
    %201 = vmatprep.subr.mxu0 0.0
    %202 = vmatpush1.xpose.msra.mxu0 %v115
    %203 = vmatprep.subr.mxu0 0.0
    %204 = vmatpush1.xpose.msra.mxu0 %v118
    %205 = vmatprep.subr.mxu0 0.0
    %206 = vmatpush1.xpose.msra.mxu0 %v121
    %207 = vmatprep.subr.mxu0 0.0
    %208 = vmatpush1.xpose.msra.mxu0 %v124
    %209 = vmatprep.subr.mxu0 0.0
    %210 = vmatpush1.xpose.msra.mxu0 %v127
    %211 = vmatprep.subr.mxu0 0.0
    %212 = vmatpush1.xpose.msra.mxu0 %v130
    %213 = vmatprep.subr.mxu0 0.0
    %214 = vmatpush1.xpose.msra.mxu0 %v133
    %215 = vmatprep.subr.mxu0 0.0
    %216 = vmatpush1.xpose.msra.mxu0 %v136
    %217 = vmatprep.subr.mxu0 0.0
    %218 = vmatpush1.xpose.msra.mxu0 %v139
    %219 = vmatprep.subr.mxu0 0.0
    %220 = vmatpush1.xpose.msra.mxu0 %v142
    %221 = vmatprep.subr.mxu0 0.0
    %222 = vmatpush1.xpose.msra.mxu0 %v145
    %223 = vmatprep.subr.mxu0 0.0
    %224 = vmatpush1.xpose.msra.mxu0 %v148
    %225 = vmatprep.subr.mxu0 0.0
    %226 = vmatpush1.xpose.msra.mxu0 %v151
    %227 = vmatprep.subr.mxu0 0.0
    %228 = vmatpush1.xpose.msra.mxu0 %v154
    %229 = vmatprep.subr.mxu0 0.0
    %230 = vmatpush1.xpose.msra.mxu0 %v157
    %231 = vmatprep.subr.mxu0 0.0
    %232 = vmatpush1.xpose.msra.mxu0 %v160
    %233 = vmatprep.subr.mxu0 0.0
    %234 = vmatpush1.xpose.msra.mxu0 %v163
    %235 = vmatprep.subr.mxu0 0.0
    %236 = vmatpush1.xpose.msra.mxu0 %v166
    %237 = vmatprep.subr.mxu0 0.0
    %238 = vmatpush1.xpose.msra.mxu0 %v169
    %239 = vmatprep.subr.mxu0 0.0
    %240 = vmatpush1.xpose.msra.mxu0 %v172
    %241 = vmatprep.subr.mxu0 0.0
    %242 = vmatpush1.xpose.msra.mxu0 %v175
    %243 = vmatprep.subr.mxu0 0.0
    %244 = vmatpush1.xpose.msra.mxu0 %v178
    %245 = vmatprep.subr.mxu0 0.0
    %246 = vmatpush1.xpose.msra.mxu0 %v181
    %247 = vmatprep.mubr.f32.mxu0 0.0
    %248 = vmatmul.mubr.f32.gmra.mrb[0].mxu0 %v76
    %v249 = vpop.f32.mrb[0].mxu0
    %v250 = vadd.f32 0.0, %v249
    %v251 = vpop.f32.mrb[0].mxu0
    %v252 = vadd.f32 0.0, %v251
    %253 = vmatprep.mubr.f32.mxu0 0.0
    %254 = vmatmul.mubr.f32.gmra.mrb[0].mxu0 %v79
    %v255 = vpop.f32.mrb[0].mxu0
    %v256 = vadd.f32 0.0, %v255
    %v257 = vpop.f32.mrb[0].mxu0
    %v258 = vadd.f32 0.0, %v257
    %259 = vmatprep.mubr.f32.mxu0 0.0
    %260 = vmatmul.mubr.f32.gmra.mrb[0].mxu0 %v82
    %v261 = vpop.f32.mrb[0].mxu0
    %v262 = vadd.f32 0.0, %v261
    %v263 = vpop.f32.mrb[0].mxu0
    %v264 = vadd.f32 0.0, %v263
    %265 = vmatprep.mubr.f32.mxu0 0.0
    %266 = vmatmul.mubr.f32.gmra.mrb[0].mxu0 %v85
    %v267 = vpop.f32.mrb[0].mxu0
    %v268 = vadd.f32 0.0, %v267
    %v269 = vpop.f32.mrb[0].mxu0
    %v270 = vadd.f32 0.0, %v269
    %271 = vdwg.mxu0
    %v272 = vsub.f32 0.0, %v250
    %v273 = vsub.f32 0.0, %v252
    %v274 = vsub.f32 0.0, %v256
    %v275 = vsub.f32 0.0, %v258
    %v276 = vsub.f32 0.0, %v262
    %v277 = vsub.f32 0.0, %v264
    %v278 = vsub.f32 0.0, %v268
    %v279 = vsub.f32 0.0, %v270
    %v280 = vmax.f32 %v272, %v276
    %v281 = vmax.f32 %v274, %v278
    %v282 = vmax.f32 %v280, %v281
    %v283 = vrot.slane %v282, 4
    %v284 = vmax.f32 %v282, %v283
    %v285 = vrot.slane %v284, 2
    %v286 = vmax.f32 %v284, %v285
    %v287 = vrot.slane %v286, 1
    %v288 = vmax.f32 %v286, %v287
    %v289 = vmax.f32 %v273, %v277
    %v290 = vmax.f32 %v275, %v279
    %v291 = vmax.f32 %v289, %v290
    %v292 = vrot.slane %v291, 4
    %v293 = vmax.f32 %v291, %v292
    %v294 = vrot.slane %v293, 2
    %v295 = vmax.f32 %v293, %v294
    %v296 = vrot.slane %v295, 1
    %v297 = vmax.f32 %v295, %v296
    %v298 = vmax.f32 %v250, %v262
    %v299 = vmax.f32 %v256, %v268
    %v300 = vmax.f32 %v298, %v299
    %v301 = vrot.slane %v300, 4
    %v302 = vmax.f32 %v300, %v301
    %v303 = vrot.slane %v302, 2
    %v304 = vmax.f32 %v302, %v303
    %v305 = vrot.slane %v304, 1
    %v306 = vmax.f32 %v304, %v305
    %v307 = vmax.f32 %v252, %v264
    %v308 = vmax.f32 %v258, %v270
    %v309 = vmax.f32 %v307, %v308
    %v310 = vrot.slane %v309, 4
    %v311 = vmax.f32 %v309, %v310
    %v312 = vrot.slane %v311, 2
    %v313 = vmax.f32 %v311, %v312
    %v314 = vrot.slane %v313, 1
    %v315 = vmax.f32 %v313, %v314
    %v316 = vsub.f32 %v272, %v288
    %v317 = vsub.f32 %v273, %v297
    %v318 = vsub.f32 %v274, %v288
    %v319 = vsub.f32 %v275, %v297
    %v320 = vsub.f32 %v276, %v288
    %v321 = vsub.f32 %v277, %v297
    %v322 = vsub.f32 %v278, %v288
    %v323 = vsub.f32 %v279, %v297
    %v324 = vmul.f32 %v316, 1.442695
    %v325 = vpow.pop %v324
    %v326 = vmul.f32 %v317, 1.442695
    %v327 = vpow.pop %v326
    %v328 = vmul.f32 %v318, 1.442695
    %v329 = vpow.pop %v328
    %v330 = vmul.f32 %v319, 1.442695
    %v331 = vpow.pop %v330
    %v332 = vmul.f32 %v320, 1.442695
    %v333 = vpow.pop %v332
    %v334 = vmul.f32 %v321, 1.442695
    %v335 = vpow.pop %v334
    %v336 = vmul.f32 %v322, 1.442695
    %v337 = vpow.pop %v336
    %v338 = vmul.f32 %v323, 1.442695
    %v339 = vpow.pop %v338
    %v340 = vsub.f32 %v250, %v306
    %v341 = vsub.f32 %v252, %v315
    %v342 = vsub.f32 %v256, %v306
    %v343 = vsub.f32 %v258, %v315
    %v344 = vsub.f32 %v262, %v306
    %v345 = vsub.f32 %v264, %v315
    %v346 = vsub.f32 %v268, %v306
    %v347 = vsub.f32 %v270, %v315
    %v348 = vmul.f32 %v340, 1.442695
    %v349 = vpow.pop %v348
    %v350 = vmul.f32 %v341, 1.442695
    %v351 = vpow.pop %v350
    %v352 = vmul.f32 %v342, 1.442695
    %v353 = vpow.pop %v352
    %v354 = vmul.f32 %v343, 1.442695
    %v355 = vpow.pop %v354
    %v356 = vmul.f32 %v344, 1.442695
    %v357 = vpow.pop %v356
    %v358 = vmul.f32 %v345, 1.442695
    %v359 = vpow.pop %v358
    %v360 = vmul.f32 %v346, 1.442695
    %v361 = vpow.pop %v360
    %v362 = vmul.f32 %v347, 1.442695
    %v363 = vpow.pop %v362
    %v365 = vsel %vm14, %v24, 0
    %367 = vmatprep.subr.mxu0 %v327
    %368 = vmatpush1.msra.mxu0 %v325
    %369 = vmatprep.subr.mxu0 %v331
    %370 = vmatpush1.msra.mxu0 %v329
    %371 = vmatprep.subr.mxu0 %v335
    %372 = vmatpush1.msra.mxu0 %v333
    %373 = vmatprep.subr.mxu0 %v339
    %374 = vmatpush1.msra.mxu0 %v337
    %375 = vmatprep.subr.mxu0 0.0
    %376 = vmatpush1.msra.mxu0 0.0
    %377 = vmatprep.subr.mxu0 0.0
    %378 = vmatpush1.msra.mxu0 0.0
    %379 = vmatprep.subr.mxu0 0.0
    %380 = vmatpush1.msra.mxu0 0.0
    %381 = vmatprep.subr.mxu0 0.0
    %382 = vmatpush1.msra.mxu0 0.0
    %383 = vmatprep.subr.mxu0 0.0
    %384 = vmatpush1.msra.mxu0 0.0
    %385 = vmatprep.subr.mxu0 0.0
    %386 = vmatpush1.msra.mxu0 0.0
    %387 = vmatprep.subr.mxu0 0.0
    %388 = vmatpush1.msra.mxu0 0.0
    %389 = vmatprep.subr.mxu0 0.0
    %390 = vmatpush1.msra.mxu0 0.0
    %391 = vmatprep.subr.mxu0 0.0
    %392 = vmatpush1.msra.mxu0 0.0
    %393 = vmatprep.subr.mxu0 0.0
    %394 = vmatpush1.msra.mxu0 0.0
    %395 = vmatprep.subr.mxu0 0.0
    %396 = vmatpush1.msra.mxu0 0.0
    %397 = vmatprep.subr.mxu0 0.0
    %398 = vmatpush1.msra.mxu0 0.0
    %399 = vmatprep.subr.mxu0 0.0
    %400 = vmatpush1.msra.mxu0 0.0
    %401 = vmatprep.subr.mxu0 0.0
    %402 = vmatpush1.msra.mxu0 0.0
    %403 = vmatprep.subr.mxu0 0.0
    %404 = vmatpush1.msra.mxu0 0.0
    %405 = vmatprep.subr.mxu0 0.0
    %406 = vmatpush1.msra.mxu0 0.0
    %407 = vmatprep.subr.mxu0 0.0
    %408 = vmatpush1.msra.mxu0 0.0
    %409 = vmatprep.subr.mxu0 0.0
    %410 = vmatpush1.msra.mxu0 0.0
    %411 = vmatprep.subr.mxu0 0.0
    %412 = vmatpush1.msra.mxu0 0.0
    %413 = vmatprep.subr.mxu0 0.0
    %414 = vmatpush1.msra.mxu0 0.0
    %415 = vmatprep.subr.mxu0 0.0
    %416 = vmatpush1.msra.mxu0 0.0
    %417 = vmatprep.subr.mxu0 0.0
    %418 = vmatpush1.msra.mxu0 0.0
    %419 = vmatprep.subr.mxu0 0.0
    %420 = vmatpush1.msra.mxu0 0.0
    %421 = vmatprep.subr.mxu0 0.0
    %422 = vmatpush1.msra.mxu0 0.0
    %423 = vmatprep.subr.mxu0 0.0
    %424 = vmatpush1.msra.mxu0 0.0
    %425 = vmatprep.subr.mxu0 0.0
    %426 = vmatpush1.msra.mxu0 0.0
    %427 = vmatprep.subr.mxu0 0.0
    %428 = vmatpush1.msra.mxu0 0.0
    %429 = vmatprep.subr.mxu0 0.0
    %430 = vmatpush1.msra.mxu0 0.0
    %431 = vmatprep.mubr.f32.mxu0 0.0
    %432 = vmatmul.mubr.f32.gmra.mrb[0].mxu0 %v365
    %v433 = vpop.f32.mrb[0].mxu0
    %v434 = vadd.f32 0.0, %v433
    %v435 = vpop.f32.mrb[0].mxu0
    %v436 = vadd.f32 0.0, %v435
    %437 = vdwg.mxu0
    %v439 = vsel %vm14, %v27, 0
    %441 = vmatprep.subr.mxu0 %v351
    %442 = vmatpush1.msra.mxu0 %v349
    %443 = vmatprep.subr.mxu0 %v355
    %444 = vmatpush1.msra.mxu0 %v353
    %445 = vmatprep.subr.mxu0 %v359
    %446 = vmatpush1.msra.mxu0 %v357
    %447 = vmatprep.subr.mxu0 %v363
    %448 = vmatpush1.msra.mxu0 %v361
    %449 = vmatprep.subr.mxu0 0.0
    %450 = vmatpush1.msra.mxu0 0.0
    %451 = vmatprep.subr.mxu0 0.0
    %452 = vmatpush1.msra.mxu0 0.0
    %453 = vmatprep.subr.mxu0 0.0
    %454 = vmatpush1.msra.mxu0 0.0
    %455 = vmatprep.subr.mxu0 0.0
    %456 = vmatpush1.msra.mxu0 0.0
    %457 = vmatprep.subr.mxu0 0.0
    %458 = vmatpush1.msra.mxu0 0.0
    %459 = vmatprep.subr.mxu0 0.0
    %460 = vmatpush1.msra.mxu0 0.0
    %461 = vmatprep.subr.mxu0 0.0
    %462 = vmatpush1.msra.mxu0 0.0
    %463 = vmatprep.subr.mxu0 0.0
    %464 = vmatpush1.msra.mxu0 0.0
    %465 = vmatprep.subr.mxu0 0.0
    %466 = vmatpush1.msra.mxu0 0.0
    %467 = vmatprep.subr.mxu0 0.0
    %468 = vmatpush1.msra.mxu0 0.0
    %469 = vmatprep.subr.mxu0 0.0
    %470 = vmatpush1.msra.mxu0 0.0
    %471 = vmatprep.subr.mxu0 0.0
    %472 = vmatpush1.msra.mxu0 0.0
    %473 = vmatprep.subr.mxu0 0.0
    %474 = vmatpush1.msra.mxu0 0.0
    %475 = vmatprep.subr.mxu0 0.0
    %476 = vmatpush1.msra.mxu0 0.0
    %477 = vmatprep.subr.mxu0 0.0
    %478 = vmatpush1.msra.mxu0 0.0
    %479 = vmatprep.subr.mxu0 0.0
    %480 = vmatpush1.msra.mxu0 0.0
    %481 = vmatprep.subr.mxu0 0.0
    %482 = vmatpush1.msra.mxu0 0.0
    %483 = vmatprep.subr.mxu0 0.0
    %484 = vmatpush1.msra.mxu0 0.0
    %485 = vmatprep.subr.mxu0 0.0
    %486 = vmatpush1.msra.mxu0 0.0
    %487 = vmatprep.subr.mxu0 0.0
    %488 = vmatpush1.msra.mxu0 0.0
    %489 = vmatprep.subr.mxu0 0.0
    %490 = vmatpush1.msra.mxu0 0.0
    %491 = vmatprep.subr.mxu0 0.0
    %492 = vmatpush1.msra.mxu0 0.0
    %493 = vmatprep.subr.mxu0 0.0
    %494 = vmatpush1.msra.mxu0 0.0
    %495 = vmatprep.subr.mxu0 0.0
    %496 = vmatpush1.msra.mxu0 0.0
    %497 = vmatprep.subr.mxu0 0.0
    %498 = vmatpush1.msra.mxu0 0.0
    %499 = vmatprep.subr.mxu0 0.0
    %500 = vmatpush1.msra.mxu0 0.0
    %501 = vmatprep.subr.mxu0 0.0
    %502 = vmatpush1.msra.mxu0 0.0
    %503 = vmatprep.subr.mxu0 0.0
    %504 = vmatpush1.msra.mxu0 0.0
    %505 = vmatprep.mubr.f32.mxu0 0.0
    %506 = vmatmul.mubr.f32.gmra.mrb[0].mxu0 %v439
    %v507 = vpop.f32.mrb[0].mxu0
    %v508 = vadd.f32 0.0, %v507
    %v509 = vpop.f32.mrb[0].mxu0
    %v510 = vadd.f32 0.0, %v509
    %511 = vdwg.mxu0
    %v512 = vadd.f32 %v17, %v288
    %v513 = vadd.f32 %v17, %v297
    %v514 = vmax.f32 %v434, 1.1754944e-38
    %v515 = vmax.f32 %v436, 1.1754944e-38
    %v516 = vlog2.pop %v514
    %v517 = vmul.f32 %v516, 0.6931472
    %v518 = vlog2.pop %v515
    %v519 = vmul.f32 %v518, 0.6931472
    %v520 = vadd.f32 %v512, %v517
    %v521 = vadd.f32 %v513, %v519
    %v522 = vadd.f32 %v21, %v306
    %v523 = vadd.f32 %v21, %v315
    %v524 = vmax.f32 %v508, 1.1754944e-38
    %v525 = vmax.f32 %v510, 1.1754944e-38
    %v526 = vlog2.pop %v524
    %v527 = vmul.f32 %v526, 0.6931472
    %v528 = vlog2.pop %v525
    %v529 = vmul.f32 %v528, 0.6931472
    %v530 = vadd.f32 %v522, %v527
    %v531 = vadd.f32 %v523, %v529
    %v532 = vadd.f32 %v520, %v530
    %v533 = vadd.f32 %v521, %v531
    %v534 = vmul.f32 %v532, 2.0
    %v535 = vmul.f32 %v533, 2.0
    %536 = vst [vmem:[#allocation2] sm:$0xff] %v534
    %537 = vst [vmem:[#allocation2 + $0x8] sm:$0xff] %v535
    // Predicated region
    $region10: #{tpu_custom_call.1} parent=1 // pred_check
      _
    $region11: #{tpu_custom_call.1} parent=1 // pred_check_branch
      %539 = sbr.rel (0) target = $region13
    $region12: #{tpu_custom_call.1} parent=1 // pred_region
      %s541 = ssub.s32 256, 256
      %542 = vsyncadd [#allocation3], %s541
      %s544 = sshll.u32 [#allocation2], 4
      %s545 = int_to_ptr.vmem [resolvable:$true] %s544
      %547 = dma.vmem_to_hbm [thread:$0]  %s545, 256, %s2, [#allocation3]
    $region13: #{tpu_custom_call.1} parent=1 // pred_fallthru
      _
    // Predicated region
    $region14: #{tpu_custom_call.1} parent=1 // pred_check
      _
    $region15: #{tpu_custom_call.1} parent=1 // pred_check_branch
      %549 = sbr.rel (0) target = $region17
    $region16: #{tpu_custom_call.1} parent=1 // pred_region
      %550 = dma.done [#allocation3], 256
    $region17: #{tpu_custom_call.1} parent=1 // pred_fallthru
      _
    %551 = vsyncpa [#allocation3], 1

</llo_original>
